<compile_context>
chip_gen: v5e
topology: v5e:2x2
jax: 0.10.0
libtpu: 0.0.40
codegen_flags: <defaults>
</compile_context>

<pallas_src>
import jax
import jax.numpy as jnp
from jax.experimental import pallas as pl
from jax.experimental.pallas import tpu as pltpu


def _make_fused_backbone_kernel(stage_fns):
    """Build a single kernel that applies all slice stages in sequence, writing each feature.

    Each stage is an in-kernel elementwise function on the current tile value.  The carried
    value never leaves vregs/VMEM between stages; each feature is stored exactly once.
    """
    def kernel(x_ref, *out_refs):
        v = x_ref[...]
        for fn, o_ref in zip(stage_fns, out_refs):
            v = fn(v)
            o_ref[...] = v
    return kernel


def _fused_backbone_call(x_nchw, stage_fns, *, max_tile_rows=512, max_tile_cols=1024):
    """Run all (elementwise) slice stages in one pallas_call.

    Returns a tuple of NCHW features, one per stage.
    """
    n, c, h, w = x_nchw.shape
    R, C = n * c, h * w                       # lane-dense: last dim = H*W (multiple of 128 here)
    x2d = x_nchw.reshape(R, C)
    dtype = x2d.dtype

    # --- tile selection ------------------------------------------------------
    # Full extent if small; otherwise multiples of (8, 128) so stores are unmasked
    # whole-vreg moves (matters most on v5e's single vector-store slot).
    if R <= max_tile_rows:
        tr = R
    else:
        tr = (max_tile_rows // 8) * 8
    if C <= max_tile_cols:
        tc = C
    else:
        tc = (max_tile_cols // 128) * 128

    grid_r = pl.cdiv(R, tr)
    grid_c = pl.cdiv(C, tc)

    # Expose >= 2 "parallel" grid iterations when cheaply possible so both v7x
    # TensorCores get work (single grid point pins everything to one TC).
    if grid_r * grid_c == 1 and C >= 256 and C % 128 == 0:
        tc = max(128, ((C // 2) // 128) * 128)
        grid_c = pl.cdiv(C, tc)

    grid = (grid_r, grid_c)
    idx = lambda i, j: (i, j)
    block = (tr, tc)

    num_feats = len(stage_fns)
    out_shape = tuple(jax.ShapeDtypeStruct((R, C), dtype) for _ in range(num_feats))
    out_specs = [pl.BlockSpec(block, idx) for _ in range(num_feats)]

    feats2d = pl.pallas_call(
        _make_fused_backbone_kernel(stage_fns),
        out_shape=out_shape,
        grid=grid,
        in_specs=[pl.BlockSpec(block, idx)],
        out_specs=out_specs,
        compiler_params=pltpu.CompilerParams(
            dimension_semantics=("parallel", "parallel"),
        ),
    )(x2d)

    if num_feats == 1:
        feats2d = (feats2d,)
    return tuple(f.reshape(n, c, h, w) for f in feats2d)


class BackbonePallas:
    """JAX/Pallas equivalent of the PyTorch Backbone container.

    `slices` is a list of in-kernel elementwise stage functions.  The reference module
    initializes it EMPTY, so by default forward(x) returns an empty tuple with zero
    compute and zero kernel launches — exactly matching the PyTorch semantics.
    When slices are present, they are all fused into a single Pallas kernel.
    """

    def __init__(self, slices=None):
        # nn.ModuleList([]) -> no submodules, no parameters.
        # TODO(synk): real backbone slices (convs / downsampling) would need their own
        # shaped kernels; only shape-preserving elementwise stages are fused here.
        self.slices = list(slices) if slices is not None else []

    def forward(self, x):
        if not self.slices:
            # Empty backbone: no compute, no HBM traffic, no launch.
            return ()
        return _fused_backbone_call(x, self.slices)

    __call__ = forward


if __name__ == "__main__":
    key = jax.random.PRNGKey(0)
    # Small NCHW input consistent with a conv-backbone interface.
    x = jax.random.normal(key, (2, 4, 16, 16), dtype=jnp.float32)

    # 1) Faithful reproduction: empty slices -> empty tuple, zero kernels launched.
    backbone = BackbonePallas()
    feats = backbone(x)
    assert feats == tuple(), "empty Backbone must return an empty tuple"

    # 2) Exercise the fused Pallas path with two identity slice stages
    #    (one kernel launch total; features must equal the carried input).
    demo = BackbonePallas(slices=[lambda v: v, lambda v: v])
    f1, f2 = demo(x)
    f1, f2 = jax.block_until_ready((f1, f2))
    assert f1.shape == x.shape and f1.dtype == x.dtype
    assert f2.shape == x.shape and f2.dtype == x.dtype
    assert bool(jnp.allclose(f1, x)) and bool(jnp.allclose(f2, x))

    print("KERNEL_OK")
</pallas_src>

<mosaic_0001>
module attributes {stable_mosaic.version = 11 : i64} {
  func.func @kernel(%arg0: i32, %arg1: i32, %arg2: memref<8x128xf32, #tpu.memory_space<vmem>>, %arg3: memref<8x128xf32, #tpu.memory_space<vmem>>, %arg4: memref<8x128xf32, #tpu.memory_space<vmem>>) attributes {dimension_semantics = [#tpu.dimension_semantics<parallel>, #tpu.dimension_semantics<parallel>], iteration_bounds = array<i64: 1, 2>, scalar_prefetch = 0 : i64, scratch_operands = 0 : i64, tpu.core_type = #tpu.core_type<tc>, window_params = [{transform_indices = @transform_0, window_bounds = array<i64: 8, 128>}, {transform_indices = @transform_1, window_bounds = array<i64: 8, 128>}, {transform_indices = @transform_2, window_bounds = array<i64: 8, 128>}]} {
    %c0 = arith.constant 0 : index
    %c0_0 = arith.constant 0 : index
    %0 = vector.load %arg2[%c0, %c0_0] : memref<8x128xf32, #tpu.memory_space<vmem>>, vector<8x128xf32>
    %c0_1 = arith.constant 0 : index
    %c0_2 = arith.constant 0 : index
    %1 = vector.load %arg3[%c0_1, %c0_2] : memref<8x128xf32, #tpu.memory_space<vmem>>, vector<8x128xf32>
    tpu.vector_store %arg3[%c0_1, %c0_2], %0 {strides = array<i32>} : memref<8x128xf32, #tpu.memory_space<vmem>>, vector<8x128xf32>,
    %c0_3 = arith.constant 0 : index
    %c0_4 = arith.constant 0 : index
    %2 = vector.load %arg4[%c0_3, %c0_4] : memref<8x128xf32, #tpu.memory_space<vmem>>, vector<8x128xf32>
    tpu.vector_store %arg4[%c0_3, %c0_4], %0 {strides = array<i32>} : memref<8x128xf32, #tpu.memory_space<vmem>>, vector<8x128xf32>,
    return
  }
  func.func @transform_0(%arg0: i32, %arg1: i32) -> (i32, i32) {
    %c0_i32 = arith.constant 0 : i32
    return %arg0, %arg1 : i32, i32
  }
  func.func @transform_1(%arg0: i32, %arg1: i32) -> (i32, i32) {
    %c0_i32 = arith.constant 0 : i32
    return %arg0, %arg1 : i32, i32
  }
  func.func @transform_2(%arg0: i32, %arg1: i32) -> (i32, i32) {
    %c0_i32 = arith.constant 0 : i32
    return %arg0, %arg1 : i32, i32
  }
}

</mosaic_0001>

<llo_original>
// kernel: tpu_custom_call.1
$region0: #{tpu_custom_call.1}
  #allocation0 [shape = 'u32[]', space=smem, size = 0x4, offset = 0x4, fixed_abs, tag = 'smem constant byte address 0x4 - core index']
  #allocation1 [shape = 'u32[72,128]{1,0:T(1,128)}', space=vmem, size = 0x9000, scoped, tag = 'internal scratch']
  %s0 = inlined_call_operand.hbm [shape: f32[8,256], index: 0, kind: input, shape index: {}]
  %s1 = inlined_call_operand.hbm [shape: f32[8,256], index: 1, kind: output, shape index: {0}]
  %s2 = inlined_call_operand.hbm [shape: f32[8,256], index: 2, kind: output, shape index: {1}]
  %3 = xla_tuple %s1, %s2
  %s4 = sld [smem:[#allocation0]]
  $region49: #{tpu_custom_call.1} parent=0
    _
  %s6 = ssub.s32 1, %s4
  %s7 = scalar_select 0, %s6, %s4
  $region1: #{tpu_custom_call.1} parent=0
    #allocation2 [shape = 'u8[8192]{0}', space=vmem, size = 0x2000, scoped, tag = 'input window, operand 0']
    #allocation3 [shape = 's32[2]{0}', space=sflag, size = 0x8, scoped, tag = 'scoped memory for tpu_custom_call.1']
    #allocation4 [shape = 's32[2]{0}', space=sflag, size = 0x8, scoped, tag = 'scoped memory for tpu_custom_call.1']
    #allocation5 [shape = 'u8[8192]{0}', space=vmem, size = 0x2000, scoped, tag = 'output window, operand 0']
    #allocation6 [shape = 'u8[8192]{0}', space=vmem, size = 0x2000, scoped, tag = 'output window, operand 1']
    #allocation7 [shape = 's32[2]{0}', space=sflag, size = 0x8, scoped, tag = 'scoped memory for tpu_custom_call.1']
    %8 = vsyncpa [#allocation3], 0
    %s9 = scalar_lea.sflag [#allocation3], 1
    %10 = vsyncpa %s9, 0
    %11 = vsyncpa [#allocation4], 0
    %s12 = scalar_lea.sflag [#allocation4], 1
    %13 = vsyncpa %s12, 0
    %14 = vsyncpa [#allocation7], 0
    %s15 = scalar_lea.sflag [#allocation7], 1
    %16 = vsyncpa %s15, 0
    loop: start=0, step=1, limit=4
    $region2: #{tpu_custom_call.1} parent=1 // loop_pre_header
      _
    $region3: #{tpu_custom_call.1} parent=1 // loop_header
      %s18 = sphi 0, %s22
      %p19 = scmp.ge.s32.totalorder %s18, 4
      %s25 = sphi 0, %s37
      %s26 = sphi 0, %s33
      %s27 = sphi 0, %s25
      %s28 = sphi 0, %s26
      %s29 = sphi 0, %s27
      %s30 = sphi 0, %s28
      %s42 = sphi 0, %s44
      %s45 = sphi 0, %s42
      %s46 = sphi 0, %s45
      %s62 = sphi 0, %s46
      %s70 = sphi 0, %s72
      %s73 = sphi 0, %s70
      %s74 = sphi 0, %s73
      %s90 = sphi 0, %s74
      %s98 = sphi 0, %s100
      %s101 = sphi 0, %s98
      %s102 = sphi 0, %s101
      %s118 = sphi 0, %s102
    $region4: #{tpu_custom_call.1} parent=1 // loop_header_branch
      %21 = sbr.rel (%p19) target = $region8
    $region5: #{tpu_custom_call.1} parent=1 // loop_body
      %s23 = ssub.s32 %s18, 1
      %s24 = ssub.s32 %s18, 2
      %s31 = sadd.s32 1, %s26
      %p32 = scmp.ge.s32.totalorder %s31, 2
      %s33 = scalar_select %p32, 0, %s31
      %s34 = sadd.s32 1, %s25
      %s35 = scalar_select %p32, %s34, %s25
      %p36 = scmp.ge.s32.totalorder %s35, 1
      %s37 = scalar_select %p36, 0, %s35
      %s38 = ssub.s32 %s25, %s37
      %s39 = ssub.s32 %s26, %s33
      %s40 = sor.u32 %s38, %s39
      %p41 = scmp.eq.s32.totalorder %s40, 0
      %s43 = sadd.s32 %s42, 1
      %s44 = scalar_select %p41, %s42, %s43
      %p47 = pneg %p41
      %p48 = scmp.eq.s32.totalorder %s18, 1
      %p49 = por %p47, %p48
      %p50 = scmp.ne.s32.totalorder %s42, %s45
      %p51 = scmp.eq.s32.totalorder %s18, 0
      %p52 = por %p50, %p51
      %p53 = scmp.ne.s32.totalorder %s42, %s45
      %p54 = scmp.eq.s32.totalorder %s23, 1
      %p55 = por %p53, %p54
      %p56 = scmp.ne.s32.totalorder %s45, %s46
      %p57 = scmp.eq.s32.totalorder %s23, 0
      %p58 = por %p56, %p57
      %p59 = scmp.ne.s32.totalorder %s45, %s46
      %p60 = scmp.eq.s32.totalorder %s24, 1
      %p61 = por %p59, %p60
      %p63 = scmp.ne.s32.totalorder %s46, %s62
      %p64 = scmp.eq.s32.totalorder %s24, 0
      %p65 = por %p63, %p64
      %s66 = ssub.s32 %s25, %s37
      %s67 = ssub.s32 %s26, %s33
      %s68 = sor.u32 %s66, %s67
      %p69 = scmp.eq.s32.totalorder %s68, 0
      %s71 = sadd.s32 %s70, 1
      %s72 = scalar_select %p69, %s70, %s71
      %p75 = pneg %p69
      %p76 = scmp.eq.s32.totalorder %s18, 1
      %p77 = por %p75, %p76
      %p78 = scmp.ne.s32.totalorder %s70, %s73
      %p79 = scmp.eq.s32.totalorder %s18, 0
      %p80 = por %p78, %p79
      %p81 = scmp.ne.s32.totalorder %s70, %s73
      %p82 = scmp.eq.s32.totalorder %s23, 1
      %p83 = por %p81, %p82
      %p84 = scmp.ne.s32.totalorder %s73, %s74
      %p85 = scmp.eq.s32.totalorder %s23, 0
      %p86 = por %p84, %p85
      %p87 = scmp.ne.s32.totalorder %s73, %s74
      %p88 = scmp.eq.s32.totalorder %s24, 1
      %p89 = por %p87, %p88
      %p91 = scmp.ne.s32.totalorder %s74, %s90
      %p92 = scmp.eq.s32.totalorder %s24, 0
      %p93 = por %p91, %p92
      %s94 = ssub.s32 %s25, %s37
      %s95 = ssub.s32 %s26, %s33
      %s96 = sor.u32 %s94, %s95
      %p97 = scmp.eq.s32.totalorder %s96, 0
      %s99 = sadd.s32 %s98, 1
      %s100 = scalar_select %p97, %s98, %s99
      %p103 = pneg %p97
      %p104 = scmp.eq.s32.totalorder %s18, 1
      %p105 = por %p103, %p104
      %p106 = scmp.ne.s32.totalorder %s98, %s101
      %p107 = scmp.eq.s32.totalorder %s18, 0
      %p108 = por %p106, %p107
      %p109 = scmp.ne.s32.totalorder %s98, %s101
      %p110 = scmp.eq.s32.totalorder %s23, 1
      %p111 = por %p109, %p110
      %p112 = scmp.ne.s32.totalorder %s101, %s102
      %p113 = scmp.eq.s32.totalorder %s23, 0
      %p114 = por %p112, %p113
      %p115 = scmp.ne.s32.totalorder %s101, %s102
      %p116 = scmp.eq.s32.totalorder %s24, 1
      %p117 = por %p115, %p116
      %p119 = scmp.ne.s32.totalorder %s102, %s118
      %p120 = scmp.eq.s32.totalorder %s24, 0
      %p121 = por %p119, %p120
      %p122 = scmp.le.s32.totalorder 1, %s18
      %p123 = scmp.lt.s32.totalorder %s18, 3
      %p124 = pnand %p122, %p123
      %p125 = pneg %p124
      // Predicated region
      $region9: #{tpu_custom_call.1} parent=5 // pred_check
        _
      $region10: #{tpu_custom_call.1} parent=5 // pred_check_branch
        %127 = sbr.rel (%p124) target = $region12
      $region11: #{tpu_custom_call.1} parent=5 // pred_region
        %s128 = ssub.s32 %s18, 1
      $region12: #{tpu_custom_call.1} parent=5 // pred_fallthru
        _
      %p129 = scmp.lt.s32.totalorder %s18, 2
      // Predicated region
      $region13: #{tpu_custom_call.1} parent=5 // pred_check
        %p130 = pneg %p129
      $region14: #{tpu_custom_call.1} parent=5 // pred_check_branch
        %132 = sbr.rel (%p130) target = $region16
      $region15: #{tpu_custom_call.1} parent=5 // pred_region
        // Predicated region
        $region17: #{tpu_custom_call.1} parent=15 // pred_check
          %p133 = pneg %p52
        $region18: #{tpu_custom_call.1} parent=15 // pred_check_branch
          %135 = sbr.rel (%p133) target = $region20
        $region19: #{tpu_custom_call.1} parent=15 // pred_region
          %s136 = sand.u32 %s42, 1
          %s137 = scalar_lea.sflag [#allocation3], %s136
          %s138 = sand.u32 %s42, 1
          %s139 = smul.addr %s138, 8
          %s140 = scalar_lea.vmem [#allocation2], %s139
          %142 = vsyncadd %s137, 0
          %s143 = smul.addr %s25, 2
          %s144 = sadd.s32 %s26, %s143
          %s145 = smul.addr %s144, 8
          %s146 = scalar_lea.hbm %s0, %s145
          %s148 = sshll.u32 %s146, 4
          %s149 = int_to_ptr.hbm [resolvable:$true] %s148
          %s150 = sshll.u32 %s140, 4
          %s151 = int_to_ptr.vmem [resolvable:$true] %s150
          %153 = dma.hbm_to_vmem [thread:$0]  %s149, 128, %s151, %s137
        $region20: #{tpu_custom_call.1} parent=15 // pred_fallthru
          _
      $region16: #{tpu_custom_call.1} parent=5 // pred_fallthru
        _
      %p154 = scmp.le.s32.totalorder 1, %s18
      %p155 = scmp.lt.s32.totalorder %s18, 3
      %p156 = pnand %p154, %p155
      %p157 = pneg %p156
      // Predicated region
      $region21: #{tpu_custom_call.1} parent=5 // pred_check
        _
      $region22: #{tpu_custom_call.1} parent=5 // pred_check_branch
        %159 = sbr.rel (%p156) target = $region24
      $region23: #{tpu_custom_call.1} parent=5 // pred_region
        %s160 = ssub.s32 %s18, 1
        %s161 = sand.u32 %s45, 1
        %s162 = scalar_lea.sflag [#allocation3], %s161
        %s163 = sand.u32 %s45, 1
        %s164 = smul.addr %s163, 8
        %s165 = scalar_lea.vmem [#allocation2], %s164
        // Predicated region
        $region25: #{tpu_custom_call.1} parent=23 // pred_check
          %p166 = pneg %p58
        $region26: #{tpu_custom_call.1} parent=23 // pred_check_branch
          %168 = sbr.rel (%p166) target = $region28
        $region27: #{tpu_custom_call.1} parent=23 // pred_region
          %170 = dma.done %s162, 128
        $region28: #{tpu_custom_call.1} parent=23 // pred_fallthru
          _
        %s171 = sand.u32 %s45, 1
        %s172 = scalar_lea.sflag [#allocation3], %s171
        %s173 = sand.u32 %s45, 1
        %s174 = smul.addr %s173, 8
        %s175 = scalar_lea.vmem [#allocation2], %s174
        %p176 = pneg %p58
        %p177 = pneg %p55
        %p178 = pneg %p86
        %p179 = pneg %p83
        %s180 = sand.u32 %s73, 1
        %s181 = scalar_lea.sflag [#allocation4], %s180
        %s182 = sand.u32 %s73, 1
        %s183 = smul.addr %s182, 8
        %s184 = scalar_lea.vmem [#allocation5], %s183
        %p185 = pneg %p114
        %p186 = pneg %p111
        %s187 = sand.u32 %s101, 1
        %s188 = scalar_lea.sflag [#allocation7], %s187
        %s189 = sand.u32 %s101, 1
        %s190 = smul.addr %s189, 8
        %s191 = scalar_lea.vmem [#allocation6], %s190
        %v192 = vld [vmem:[%s165] sm:$0xff]
        %193 = vst [vmem:[%s184] sm:$0xff] %v192
        %194 = vst [vmem:[%s191] sm:$0xff] %v192
        %s195 = sand.u32 %s73, 1
        %s196 = scalar_lea.sflag [#allocation4], %s195
        %s197 = sand.u32 %s73, 1
        %s198 = smul.addr %s197, 8
        %s199 = scalar_lea.vmem [#allocation5], %s198
        %s200 = sand.u32 %s101, 1
        %s201 = scalar_lea.sflag [#allocation7], %s200
        %s202 = sand.u32 %s101, 1
        %s203 = smul.addr %s202, 8
        %s204 = scalar_lea.vmem [#allocation6], %s203
        // Predicated region
        $region29: #{tpu_custom_call.1} parent=23 // pred_check
          %p205 = pneg %p83
        $region30: #{tpu_custom_call.1} parent=23 // pred_check_branch
          %207 = sbr.rel (%p205) target = $region32
        $region31: #{tpu_custom_call.1} parent=23 // pred_region
          %209 = vsyncadd %s196, 0
          %s210 = smul.addr %s27, 2
          %s211 = sadd.s32 %s28, %s210
          %s212 = smul.addr %s211, 8
          %s213 = scalar_lea.hbm %s1, %s212
          %s215 = sshll.u32 %s199, 4
          %s216 = int_to_ptr.vmem [resolvable:$true] %s215
          %s217 = sshll.u32 %s213, 4
          %s218 = int_to_ptr.hbm [resolvable:$true] %s217
          %220 = dma.vmem_to_hbm [thread:$0]  %s216, 128, %s218, %s196
        $region32: #{tpu_custom_call.1} parent=23 // pred_fallthru
          _
        // Predicated region
        $region33: #{tpu_custom_call.1} parent=23 // pred_check
          %p221 = pneg %p111
        $region34: #{tpu_custom_call.1} parent=23 // pred_check_branch
          %223 = sbr.rel (%p221) target = $region36
        $region35: #{tpu_custom_call.1} parent=23 // pred_region
          %225 = vsyncadd %s201, 0
          %s226 = smul.addr %s27, 2
          %s227 = sadd.s32 %s28, %s226
          %s228 = smul.addr %s227, 8
          %s229 = scalar_lea.hbm %s2, %s228
          %s231 = sshll.u32 %s204, 4
          %s232 = int_to_ptr.vmem [resolvable:$true] %s231
          %s233 = sshll.u32 %s229, 4
          %s234 = int_to_ptr.hbm [resolvable:$true] %s233
          %236 = dma.vmem_to_hbm [thread:$0]  %s232, 128, %s234, %s201
        $region36: #{tpu_custom_call.1} parent=23 // pred_fallthru
          _
      $region24: #{tpu_custom_call.1} parent=5 // pred_fallthru
        _
      %p237 = scmp.le.s32.totalorder 2, %s18
      // Predicated region
      $region37: #{tpu_custom_call.1} parent=5 // pred_check
        %p238 = pneg %p237
      $region38: #{tpu_custom_call.1} parent=5 // pred_check_branch
        %240 = sbr.rel (%p238) target = $region40
      $region39: #{tpu_custom_call.1} parent=5 // pred_region
        %s241 = ssub.s32 %s18, 2
        // Predicated region
        $region41: #{tpu_custom_call.1} parent=39 // pred_check
          %p242 = pneg %p89
        $region42: #{tpu_custom_call.1} parent=39 // pred_check_branch
          %244 = sbr.rel (%p242) target = $region44
        $region43: #{tpu_custom_call.1} parent=39 // pred_region
          %s245 = sand.u32 %s74, 1
          %s246 = scalar_lea.sflag [#allocation4], %s245
          %s247 = sand.u32 %s74, 1
          %s248 = smul.addr %s247, 8
          %s249 = scalar_lea.vmem [#allocation5], %s248
          %251 = dma.done %s246, 128
        $region44: #{tpu_custom_call.1} parent=39 // pred_fallthru
          _
        // Predicated region
        $region45: #{tpu_custom_call.1} parent=39 // pred_check
          %p252 = pneg %p117
        $region46: #{tpu_custom_call.1} parent=39 // pred_check_branch
          %254 = sbr.rel (%p252) target = $region48
        $region47: #{tpu_custom_call.1} parent=39 // pred_region
          %s255 = sand.u32 %s102, 1
          %s256 = scalar_lea.sflag [#allocation7], %s255
          %s257 = sand.u32 %s102, 1
          %s258 = smul.addr %s257, 8
          %s259 = scalar_lea.vmem [#allocation6], %s258
          %261 = dma.done %s256, 128
        $region48: #{tpu_custom_call.1} parent=39 // pred_fallthru
          _
      $region40: #{tpu_custom_call.1} parent=5 // pred_fallthru
        _
    $region6: #{tpu_custom_call.1} parent=1 // loop_footer
      %s22 = sadd.s32 1, %s18
    $region7: #{tpu_custom_call.1} parent=1 // loop_footer_branch
      %17 = sbr.rel target = $region3
    $region8: #{tpu_custom_call.1} parent=1 // loop_exit
      _
    %262 = vsyncpa [#allocation3], 1
    %s263 = scalar_lea.sflag [#allocation3], 1
    %264 = vsyncpa %s263, 1
    %265 = vsyncpa [#allocation4], 1
    %s266 = scalar_lea.sflag [#allocation4], 1
    %267 = vsyncpa %s266, 1
    %268 = vsyncpa [#allocation7], 1
    %s269 = scalar_lea.sflag [#allocation7], 1
    %270 = vsyncpa %s269, 1

</llo_original>
